<compile_context>
chip_gen: v5e
topology: v5e:2x2
jax: 0.10.0
libtpu: 0.0.40
codegen_flags: <defaults>
</compile_context>

<pallas_src>
import jax
import jax.numpy as jnp
from jax.experimental import pallas as pl
from jax.experimental.pallas import tpu as pltpu


def _binarizer_kernel(thr_ref, x_ref, o_ref):
    # thr_ref: (1,) scalar threshold in SMEM
    # x_ref / o_ref: lane-dense VMEM tiles
    thr = thr_ref[0]
    o_ref[...] = (x_ref[...] > thr).astype(o_ref.dtype)


def _round_down_mult(v, m):
    return (v // m) * m


def _generation_budgets():
    """(max_block_bytes, vmem_limit_cap) per TPU generation."""
    max_block = 6 * 1024 * 1024         # v7x-safe default (64 MiB VMEM / TC)
    vmem_cap = 32 * 1024 * 1024
    try:
        info = pltpu.get_tpu_info()
        vmem_phys = getattr(info, "vmem_capacity_bytes", 64 * 1024 * 1024)
        if vmem_phys >= 96 * 1024 * 1024:   # v5e / v6e: 128 MiB physical VMEM
            max_block = 12 * 1024 * 1024
            vmem_cap = 64 * 1024 * 1024
    except Exception:
        pass                                # conservative (v7x-safe) defaults
    return max_block, vmem_cap


def _pick_lane_width(total):
    """Largest W = 128*k (k<=32) that evenly divides `total`, else None."""
    for k in range(32, 0, -1):
        w = 128 * k
        if total % w == 0:
            return w
    return None


def _choose_tiles(M, N, itemsize, max_block_bytes):
    """Return (tm, tn). tn == N means full-width row slabs (1-D row grid)."""
    # Wide-feature fallback: even 8 full-width rows exceed the budget ->
    # tile the feature axis too (tn a multiple of 128, still lane-dense).
    if 8 * N * itemsize > max_block_bytes and N > 128:
        tn = _round_down_mult(max_block_bytes // (8 * itemsize), 128)
        tn = max(tn, 128)
        tn = min(tn, _round_down_mult(N, 128))
        tm = M if M < 8 else 8
        return tm, tn

    # Common case: full-width lane-dense row slabs, sized purely from the
    # byte budget (no artificial row cap).
    rows = max_block_bytes // (N * itemsize)
    rows = max(_round_down_mult(rows, 8), 8)
    if M >= 16:
        # Guarantee >= 2 row blocks so both TensorCores on v7x share HBM BW
        # (harmless on single-TC v5e/v6e).
        half = -(-M // 2)            # cdiv(M, 2)
        half = -(-half // 8) * 8     # round up to a multiple of 8
        rows = min(rows, half)
    if rows >= M:
        return M, N                  # single block, zero per-step overhead
    return rows, N


def binarizer(x: jax.Array, threshold: jax.Array, *,
              block_rows: int | None = None,
              max_block_bytes: int | None = None) -> jax.Array:
    """Pallas Binarizer: (x > threshold).astype(float32)."""
    orig_shape = x.shape
    thr = jnp.asarray(threshold, dtype=jnp.float32).reshape((1,))

    # Collapse to 2-D (rows, features).
    if x.ndim == 1:
        x2 = x.reshape(1, -1)
    elif x.ndim == 2:
        x2 = x
    else:
        x2 = x.reshape(-1, x.shape[-1])
    M, N = x2.shape
    itemsize = x2.dtype.itemsize

    # Lane-dense relayout for non-128-aligned feature dims (free layout
    # plumbing for an elementwise op); avoids masked partial stores.
    if N % 128 != 0:
        w = _pick_lane_width(M * N)
        if w is not None:
            x2 = x2.reshape(-1, w)
            M, N = x2.shape

    gen_block, vmem_cap = _generation_budgets()
    budget = max_block_bytes if max_block_bytes is not None else gen_block

    tm, tn = _choose_tiles(M, N, itemsize, budget)
    if block_rows is not None:
        tm = min(block_rows, M)

    block_bytes = tm * tn * max(itemsize, 4)  # f32 output dominates
    vmem_limit = min(max(4 * block_bytes + (2 * 1024 * 1024),
                         16 * 1024 * 1024), vmem_cap)

    cost = pl.CostEstimate(flops=M * N, transcendentals=0,
                           bytes_accessed=2 * M * N * 4)

    if tn >= N:
        grid = (pl.cdiv(M, tm),)
        x_spec = pl.BlockSpec((tm, N), lambda i: (i, 0))
        o_spec = pl.BlockSpec((tm, N), lambda i: (i, 0))
        dims = ("parallel",)
    else:
        grid = (pl.cdiv(M, tm), pl.cdiv(N, tn))
        x_spec = pl.BlockSpec((tm, tn), lambda i, j: (i, j))
        o_spec = pl.BlockSpec((tm, tn), lambda i, j: (i, j))
        dims = ("parallel", "parallel")

    out2 = pl.pallas_call(
        _binarizer_kernel,
        out_shape=jax.ShapeDtypeStruct((M, N), jnp.float32),
        grid=grid,
        in_specs=[
            pl.BlockSpec(memory_space=pltpu.SMEM),  # threshold scalar in SMEM
            x_spec,
        ],
        out_specs=o_spec,
        compiler_params=pltpu.CompilerParams(
            dimension_semantics=dims,
            vmem_limit_bytes=vmem_limit,
        ),
        cost_estimate=cost,
    )(thr, x2)

    return out2.reshape(orig_shape)


if __name__ == "__main__":
    key = jax.random.PRNGKey(0)

    # Deterministic parameter init (module stores a single scalar threshold).
    threshold_value = 0.1
    threshold = jnp.asarray([threshold_value], dtype=jnp.float32)

    # Tabular-ish input: batch=16, features=256.  M >= 16 -> >= 2 row blocks
    # so the parallel grid axis can feed both v7x TensorCores.
    x = jax.random.normal(key, (16, 256), dtype=jnp.float32)
    out = jax.block_until_ready(binarizer(x, threshold))
    ref = (x > threshold_value).astype(jnp.float32)
    assert out.shape == ref.shape and out.dtype == ref.dtype
    assert bool(jnp.all(out == ref))

    # Multi-block row grid with a ragged last block (72 rows, block_rows=32).
    x2 = jax.random.normal(jax.random.PRNGKey(1), (72, 256), dtype=jnp.float32)
    out2 = jax.block_until_ready(binarizer(x2, threshold, block_rows=32))
    ref2 = (x2 > threshold_value).astype(jnp.float32)
    assert bool(jnp.all(out2 == ref2))

    # Non-128-aligned feature dim -> wrapper relayouts to a lane-dense view.
    x3 = jax.random.normal(jax.random.PRNGKey(2), (16, 96), dtype=jnp.float32)
    out3 = jax.block_until_ready(binarizer(x3, threshold))
    ref3 = (x3 > threshold_value).astype(jnp.float32)
    assert out3.shape == ref3.shape
    assert bool(jnp.all(out3 == ref3))

    # Wide-N fallback path (forced small budget -> 2-D grid over features).
    x4 = jax.random.normal(jax.random.PRNGKey(3), (16, 2048), dtype=jnp.float32)
    out4 = jax.block_until_ready(binarizer(x4, threshold,
                                           max_block_bytes=32 * 1024))
    ref4 = (x4 > threshold_value).astype(jnp.float32)
    assert bool(jnp.all(out4 == ref4))

    print("KERNEL_OK")
</pallas_src>

<mosaic_0001>
module attributes {stable_mosaic.version = 11 : i64} {
  func.func @_binarizer_kernel(%arg0: i32, %arg1: memref<1xf32, #tpu.memory_space<smem>>, %arg2: memref<8x256xf32, #tpu.memory_space<vmem>>, %arg3: memref<8x256xf32, #tpu.memory_space<vmem>>) attributes {dimension_semantics = [#tpu.dimension_semantics<parallel>], iteration_bounds = array<i64: 2>, scalar_prefetch = 0 : i64, scratch_operands = 0 : i64, tpu.core_type = #tpu.core_type<tc>, window_params = [{transform_indices = @transform_0, window_bounds = array<i64: 1>}, {transform_indices = @transform_1, window_bounds = array<i64: 8, 256>}, {transform_indices = @transform_2, window_bounds = array<i64: 8, 256>}]} {
    %c0 = arith.constant 0 : index
    %0 = memref.load %arg1[%c0] : memref<1xf32, #tpu.memory_space<smem>>
    %c0_0 = arith.constant 0 : index
    %c0_1 = arith.constant 0 : index
    %1 = vector.load %arg2[%c0_0, %c0_1] : memref<8x256xf32, #tpu.memory_space<vmem>>, vector<8x256xf32>
    %2 = vector.broadcast %0 : f32 to vector<8x256xf32>
    %3 = arith.cmpf ogt, %1, %2 : vector<8x256xf32>
    %4 = arith.extui %3 : vector<8x256xi1> to vector<8x256xi32>
    %5 = arith.sitofp %4 : vector<8x256xi32> to vector<8x256xf32>
    %c0_2 = arith.constant 0 : index
    %c0_3 = arith.constant 0 : index
    %6 = vector.load %arg3[%c0_2, %c0_3] : memref<8x256xf32, #tpu.memory_space<vmem>>, vector<8x256xf32>
    tpu.vector_store %arg3[%c0_2, %c0_3], %5 {strides = array<i32>} : memref<8x256xf32, #tpu.memory_space<vmem>>, vector<8x256xf32>,
    return
  }
  func.func @transform_0(%arg0: i32) -> i32 {
    %c0_i32 = arith.constant 0 : i32
    %c0_i32_0 = arith.constant 0 : i32
    return %c0_i32 : i32
  }
  func.func @transform_1(%arg0: i32) -> (i32, i32) {
    %c0_i32 = arith.constant 0 : i32
    %c0_i32_0 = arith.constant 0 : i32
    return %arg0, %c0_i32 : i32, i32
  }
  func.func @transform_2(%arg0: i32) -> (i32, i32) {
    %c0_i32 = arith.constant 0 : i32
    %c0_i32_0 = arith.constant 0 : i32
    return %arg0, %c0_i32 : i32, i32
  }
}

</mosaic_0001>

<llo_original>
// kernel: tpu_custom_call.1
$region0: #{tpu_custom_call.1}
  #allocation0 [shape = 'u32[]', space=smem, size = 0x4, offset = 0x4, fixed_abs, tag = 'smem constant byte address 0x4 - core index']
  #allocation1 [shape = 'u32[72,128]{1,0:T(1,128)}', space=vmem, size = 0x9000, scoped, tag = 'internal scratch']
  #allocation2 [shape = 'f32[1]{0:T(128)S(6)}', space=smem, size = 0x200, scoped, tag = 'scoped memory for tpu_custom_call.1']
  %s0 = inlined_call_operand.<no memory space> [shape: f32[1], index: 0, kind: input, shape index: {}]
  %s1 = inlined_call_operand.hbm [shape: f32[16,256], index: 1, kind: input, shape index: {}]
  %s2 = inlined_call_operand.hbm [shape: f32[16,256], index: 2, kind: output, shape index: {}]
  %s3 = sld [smem:[#allocation0]]
  $region45: #{tpu_custom_call.1} parent=0
    _
  %s5 = ssub.s32 1, %s3
  %s6 = scalar_select 0, %s5, %s3
  %7 = sst [smem:[#allocation2]] %s0
  $region1: #{tpu_custom_call.1} parent=0
    #allocation3 [shape = 'u8[16384]{0}', space=vmem, size = 0x4000, scoped, tag = 'input window, operand 1']
    #allocation4 [shape = 's32[2]{0}', space=sflag, size = 0x8, scoped, tag = 'scoped memory for tpu_custom_call.1']
    #allocation5 [shape = 's32[2]{0}', space=sflag, size = 0x8, scoped, tag = 'scoped memory for tpu_custom_call.1']
    #allocation6 [shape = 'u8[16384]{0}', space=vmem, size = 0x4000, scoped, tag = 'output window, operand 0']
    %8 = vsyncpa [#allocation4], 0
    %s9 = scalar_lea.sflag [#allocation4], 1
    %10 = vsyncpa %s9, 0
    %11 = vsyncpa [#allocation5], 0
    %s12 = scalar_lea.sflag [#allocation5], 1
    %13 = vsyncpa %s12, 0
    loop: start=0, step=1, limit=4
    $region2: #{tpu_custom_call.1} parent=1 // loop_pre_header
      _
    $region3: #{tpu_custom_call.1} parent=1 // loop_header
      %s15 = sphi 0, %s19
      %p16 = scmp.ge.s32.totalorder %s15, 4
      %s23 = sphi 0, %s23
      %s25 = sphi 0, %s23
      %s26 = sphi 0, %s25
      %s40 = sphi 0, %s26
      %s46 = sphi 0, %s48
      %s49 = sphi 0, %s46
      %s50 = sphi 0, %s49
      %s66 = sphi 0, %s50
      %s72 = sphi 0, %s74
      %s75 = sphi 0, %s72
      %s76 = sphi 0, %s75
      %s92 = sphi 0, %s76
    $region4: #{tpu_custom_call.1} parent=1 // loop_header_branch
      %18 = sbr.rel (%p16) target = $region8
    $region5: #{tpu_custom_call.1} parent=1 // loop_body
      %s20 = ssub.s32 %s15, 1
      %s21 = ssub.s32 %s15, 2
      %s22 = sadd.s32 %s15, 1
      %s24 = sadd.s32 %s23, 1
      %p27 = scmp.eq.s32.totalorder %s15, 1
      %p28 = scmp.ne.s32.totalorder %s23, %s25
      %p29 = scmp.eq.s32.totalorder %s15, 0
      %p30 = por %p28, %p29
      %p31 = scmp.ne.s32.totalorder %s23, %s25
      %p32 = scmp.eq.s32.totalorder %s20, 1
      %p33 = por %p31, %p32
      %p34 = scmp.ne.s32.totalorder %s25, %s26
      %p35 = scmp.eq.s32.totalorder %s20, 0
      %p36 = por %p34, %p35
      %p37 = scmp.ne.s32.totalorder %s25, %s26
      %p38 = scmp.eq.s32.totalorder %s21, 1
      %p39 = por %p37, %p38
      %p41 = scmp.ne.s32.totalorder %s26, %s40
      %p42 = scmp.eq.s32.totalorder %s21, 0
      %p43 = por %p41, %p42
      %s44 = ssub.s32 %s15, %s22
      %p45 = scmp.eq.s32.totalorder %s44, 0
      %s47 = sadd.s32 %s46, 1
      %s48 = scalar_select %p45, %s46, %s47
      %p51 = pneg %p45
      %p52 = scmp.eq.s32.totalorder %s15, 1
      %p53 = por %p51, %p52
      %p54 = scmp.ne.s32.totalorder %s46, %s49
      %p55 = scmp.eq.s32.totalorder %s15, 0
      %p56 = por %p54, %p55
      %p57 = scmp.ne.s32.totalorder %s46, %s49
      %p58 = scmp.eq.s32.totalorder %s20, 1
      %p59 = por %p57, %p58
      %p60 = scmp.ne.s32.totalorder %s49, %s50
      %p61 = scmp.eq.s32.totalorder %s20, 0
      %p62 = por %p60, %p61
      %p63 = scmp.ne.s32.totalorder %s49, %s50
      %p64 = scmp.eq.s32.totalorder %s21, 1
      %p65 = por %p63, %p64
      %p67 = scmp.ne.s32.totalorder %s50, %s66
      %p68 = scmp.eq.s32.totalorder %s21, 0
      %p69 = por %p67, %p68
      %s70 = ssub.s32 %s15, %s22
      %p71 = scmp.eq.s32.totalorder %s70, 0
      %s73 = sadd.s32 %s72, 1
      %s74 = scalar_select %p71, %s72, %s73
      %p77 = pneg %p71
      %p78 = scmp.eq.s32.totalorder %s15, 1
      %p79 = por %p77, %p78
      %p80 = scmp.ne.s32.totalorder %s72, %s75
      %p81 = scmp.eq.s32.totalorder %s15, 0
      %p82 = por %p80, %p81
      %p83 = scmp.ne.s32.totalorder %s72, %s75
      %p84 = scmp.eq.s32.totalorder %s20, 1
      %p85 = por %p83, %p84
      %p86 = scmp.ne.s32.totalorder %s75, %s76
      %p87 = scmp.eq.s32.totalorder %s20, 0
      %p88 = por %p86, %p87
      %p89 = scmp.ne.s32.totalorder %s75, %s76
      %p90 = scmp.eq.s32.totalorder %s21, 1
      %p91 = por %p89, %p90
      %p93 = scmp.ne.s32.totalorder %s76, %s92
      %p94 = scmp.eq.s32.totalorder %s21, 0
      %p95 = por %p93, %p94
      %p96 = scmp.le.s32.totalorder 1, %s15
      %p97 = scmp.lt.s32.totalorder %s15, 3
      %p98 = pnand %p96, %p97
      %p99 = pneg %p98
      // Predicated region
      $region9: #{tpu_custom_call.1} parent=5 // pred_check
        _
      $region10: #{tpu_custom_call.1} parent=5 // pred_check_branch
        %101 = sbr.rel (%p98) target = $region12
      $region11: #{tpu_custom_call.1} parent=5 // pred_region
        %s102 = ssub.s32 %s15, 1
        // Predicated region
        $region13: #{tpu_custom_call.1} parent=11 // pred_check
          %p103 = pneg %p36
        $region14: #{tpu_custom_call.1} parent=11 // pred_check_branch
          %105 = sbr.rel (%p103) target = $region16
        $region15: #{tpu_custom_call.1} parent=11 // pred_region
          _
        $region16: #{tpu_custom_call.1} parent=11 // pred_fallthru
          _
      $region12: #{tpu_custom_call.1} parent=5 // pred_fallthru
        _
      %p106 = scmp.lt.s32.totalorder %s15, 2
      // Predicated region
      $region17: #{tpu_custom_call.1} parent=5 // pred_check
        %p107 = pneg %p106
      $region18: #{tpu_custom_call.1} parent=5 // pred_check_branch
        %109 = sbr.rel (%p107) target = $region20
      $region19: #{tpu_custom_call.1} parent=5 // pred_region
        // Predicated region
        $region21: #{tpu_custom_call.1} parent=19 // pred_check
          %p110 = pneg %p56
        $region22: #{tpu_custom_call.1} parent=19 // pred_check_branch
          %112 = sbr.rel (%p110) target = $region24
        $region23: #{tpu_custom_call.1} parent=19 // pred_region
          %s113 = sand.u32 %s46, 1
          %s114 = scalar_lea.sflag [#allocation4], %s113
          %s115 = sand.u32 %s46, 1
          %s116 = smul.addr %s115, 16
          %s117 = scalar_lea.vmem [#allocation3], %s116
          %119 = vsyncadd %s114, 0
          %s120 = smul.addr %s15, 2
          %s121 = smul.addr %s120, 8
          %s122 = scalar_lea.hbm %s1, %s121
          %s124 = sshll.u32 %s122, 4
          %s125 = int_to_ptr.hbm [resolvable:$true] %s124
          %s126 = sshll.u32 %s117, 4
          %s127 = int_to_ptr.vmem [resolvable:$true] %s126
          %129 = dma.hbm_to_vmem [thread:$0]  %s125, 256, %s127, %s114
        $region24: #{tpu_custom_call.1} parent=19 // pred_fallthru
          _
      $region20: #{tpu_custom_call.1} parent=5 // pred_fallthru
        _
      %p130 = scmp.le.s32.totalorder 1, %s15
      %p131 = scmp.lt.s32.totalorder %s15, 3
      %p132 = pnand %p130, %p131
      %p133 = pneg %p132
      // Predicated region
      $region25: #{tpu_custom_call.1} parent=5 // pred_check
        _
      $region26: #{tpu_custom_call.1} parent=5 // pred_check_branch
        %135 = sbr.rel (%p132) target = $region28
      $region27: #{tpu_custom_call.1} parent=5 // pred_region
        %s136 = ssub.s32 %s15, 1
        %s137 = sand.u32 %s49, 1
        %s138 = scalar_lea.sflag [#allocation4], %s137
        %s139 = sand.u32 %s49, 1
        %s140 = smul.addr %s139, 16
        %s141 = scalar_lea.vmem [#allocation3], %s140
        // Predicated region
        $region29: #{tpu_custom_call.1} parent=27 // pred_check
          %p142 = pneg %p62
        $region30: #{tpu_custom_call.1} parent=27 // pred_check_branch
          %144 = sbr.rel (%p142) target = $region32
        $region31: #{tpu_custom_call.1} parent=27 // pred_region
          %146 = dma.done %s138, 256
        $region32: #{tpu_custom_call.1} parent=27 // pred_fallthru
          _
        %p147 = pneg %p36
        %p148 = pneg %p33
        %s149 = sand.u32 %s49, 1
        %s150 = scalar_lea.sflag [#allocation4], %s149
        %s151 = sand.u32 %s49, 1
        %s152 = smul.addr %s151, 16
        %s153 = scalar_lea.vmem [#allocation3], %s152
        %p154 = pneg %p62
        %p155 = pneg %p59
        %p156 = pneg %p88
        %p157 = pneg %p85
        %s158 = sand.u32 %s75, 1
        %s159 = scalar_lea.sflag [#allocation5], %s158
        %s160 = sand.u32 %s75, 1
        %s161 = smul.addr %s160, 16
        %s162 = scalar_lea.vmem [#allocation6], %s161
        %s163 = sld [smem:[#allocation2]]
        %v164 = vld [vmem:[%s141] sm:$0xff]
        %v165 = vld [vmem:[%s141 + $0x8] sm:$0xff]
        %v166 = vstv %s163
        %vm167 = vcmp.gt.f32.partialorder %v164, %v166
        %vm168 = vcmp.gt.f32.partialorder %v165, %v166
        %v169 = vsel %vm167, 1, 0
        %v170 = vsel %vm168, 1, 0
        %v171 = vcvt.s32.f32 %v169
        %v172 = vcvt.s32.f32 %v170
        %173 = vst [vmem:[%s162] sm:$0xff] %v171
        %174 = vst [vmem:[%s162 + $0x8] sm:$0xff] %v172
        %s175 = sand.u32 %s75, 1
        %s176 = scalar_lea.sflag [#allocation5], %s175
        %s177 = sand.u32 %s75, 1
        %s178 = smul.addr %s177, 16
        %s179 = scalar_lea.vmem [#allocation6], %s178
        // Predicated region
        $region33: #{tpu_custom_call.1} parent=27 // pred_check
          %p180 = pneg %p85
        $region34: #{tpu_custom_call.1} parent=27 // pred_check_branch
          %182 = sbr.rel (%p180) target = $region36
        $region35: #{tpu_custom_call.1} parent=27 // pred_region
          %184 = vsyncadd %s176, 0
          %s185 = smul.addr %s20, 2
          %s186 = smul.addr %s185, 8
          %s187 = scalar_lea.hbm %s2, %s186
          %s189 = sshll.u32 %s179, 4
          %s190 = int_to_ptr.vmem [resolvable:$true] %s189
          %s191 = sshll.u32 %s187, 4
          %s192 = int_to_ptr.hbm [resolvable:$true] %s191
          %194 = dma.vmem_to_hbm [thread:$0]  %s190, 256, %s192, %s176
        $region36: #{tpu_custom_call.1} parent=27 // pred_fallthru
          _
      $region28: #{tpu_custom_call.1} parent=5 // pred_fallthru
        _
      %p195 = scmp.le.s32.totalorder 2, %s15
      // Predicated region
      $region37: #{tpu_custom_call.1} parent=5 // pred_check
        %p196 = pneg %p195
      $region38: #{tpu_custom_call.1} parent=5 // pred_check_branch
        %198 = sbr.rel (%p196) target = $region40
      $region39: #{tpu_custom_call.1} parent=5 // pred_region
        %s199 = ssub.s32 %s15, 2
        // Predicated region
        $region41: #{tpu_custom_call.1} parent=39 // pred_check
          %p200 = pneg %p91
        $region42: #{tpu_custom_call.1} parent=39 // pred_check_branch
          %202 = sbr.rel (%p200) target = $region44
        $region43: #{tpu_custom_call.1} parent=39 // pred_region
          %s203 = sand.u32 %s76, 1
          %s204 = scalar_lea.sflag [#allocation5], %s203
          %s205 = sand.u32 %s76, 1
          %s206 = smul.addr %s205, 16
          %s207 = scalar_lea.vmem [#allocation6], %s206
          %209 = dma.done %s204, 256
        $region44: #{tpu_custom_call.1} parent=39 // pred_fallthru
          _
      $region40: #{tpu_custom_call.1} parent=5 // pred_fallthru
        _
    $region6: #{tpu_custom_call.1} parent=1 // loop_footer
      %s19 = sadd.s32 1, %s15
    $region7: #{tpu_custom_call.1} parent=1 // loop_footer_branch
      %14 = sbr.rel target = $region3
    $region8: #{tpu_custom_call.1} parent=1 // loop_exit
      _
    %210 = vsyncpa [#allocation4], 1
    %s211 = scalar_lea.sflag [#allocation4], 1
    %212 = vsyncpa %s211, 1
    %213 = vsyncpa [#allocation5], 1
    %s214 = scalar_lea.sflag [#allocation5], 1
    %215 = vsyncpa %s214, 1

</llo_original>
